<compile_context>
chip_gen: v7x
topology: tpu7x:2x2x1
jax: 0.10.0
libtpu: 0.0.40
codegen_flags: <defaults>
</compile_context>

<pallas_src>
import math

import jax
import jax.numpy as jnp
from jax import lax
from jax.experimental import pallas as pl
from jax.experimental.pallas import tpu as pltpu


def _round_up(v, k):
    return ((v + k - 1) // k) * k


# ---------------------------------------------------------------------------
# Prologue: row-wise L2 normalization (F.normalize(dim=-1), eps=1e-12).
# ---------------------------------------------------------------------------
def _l2_normalize_kernel(x_ref, o_ref):
    x = x_ref[...].astype(jnp.float32)
    sq = jnp.sum(x * x, axis=-1, keepdims=True)
    # x / max(||x||, 1e-12)  ==  x * rsqrt(max(||x||^2, 1e-24))   (EUP rsqrt)
    inv = lax.rsqrt(jnp.maximum(sq, jnp.float32(1e-24)))
    o_ref[...] = (x * inv).astype(o_ref.dtype)


def _l2_normalize_rows(x, *, tile_rows):
    rows, d = x.shape
    assert rows % tile_rows == 0
    return pl.pallas_call(
        _l2_normalize_kernel,
        out_shape=jax.ShapeDtypeStruct((rows, d), x.dtype),
        grid_spec=pltpu.PrefetchScalarGridSpec(
            num_scalar_prefetch=0,
            grid=(rows // tile_rows,),
            in_specs=[pl.BlockSpec((tile_rows, d), lambda i: (i, 0))],
            out_specs=pl.BlockSpec((tile_rows, d), lambda i: (i, 0)),
        ),
        compiler_params=pltpu.CompilerParams(dimension_semantics=("parallel",)),
    )(x)


# ---------------------------------------------------------------------------
# Main ArcMargin kernel: one (TB, TC) output tile per grid step.
# ---------------------------------------------------------------------------
def _make_arc_margin_kernel(s, cos_m, sin_m, th, mm, easy_margin, ls_eps,
                            out_features, tile_c, mxu_dtype):
    def kernel(xn_ref, w_ref, label_ref, out_ref):
        xn = xn_ref[...]                            # (TB, D), pre-normalized
        w = w_ref[...].astype(jnp.float32)          # (TC, D)
        label = label_ref[...]                      # (TB, 1) int32

        # Normalize the weight tile (rsqrt -> EUP; hidden under the weight DMA).
        wsq = jnp.sum(w * w, axis=-1, keepdims=True)
        wn = w * lax.rsqrt(jnp.maximum(wsq, jnp.float32(1e-24)))

        # cosine = xn @ wn.T without materializing a transpose:
        # contract both operands on their last (feature) dim.
        cosine = lax.dot_general(
            xn.astype(mxu_dtype), wn.astype(mxu_dtype),
            dimension_numbers=(((1,), (1,)), ((), ())),
            preferred_element_type=jnp.float32)     # (TB, TC)

        # Clamp before sqrt: cosine can be numerically >= 1.
        sine = jnp.sqrt(jnp.clip(1.0 - cosine * cosine, 0.0, 1.0))
        phi = cosine * cos_m - sine * sin_m
        if easy_margin:
            phi = jnp.where(cosine > 0.0, phi, cosine)
        else:
            phi = jnp.where(cosine > th, phi, cosine - mm)

        # Global column ids of this class tile (scatter_-equivalent one-hot).
        col = pl.program_id(1) * tile_c + lax.broadcasted_iota(
            jnp.int32, cosine.shape, 1)
        is_target = col == label                    # (TB, TC) via broadcast

        if ls_eps > 0.0:
            one_hot = (1.0 - ls_eps) * is_target.astype(jnp.float32) \
                + (ls_eps / out_features)
            output = one_hot * phi + (1.0 - one_hot) * cosine
        else:
            output = jnp.where(is_target, phi, cosine)

        out_ref[...] = (output * s).astype(out_ref.dtype)

    return kernel


def arc_margin_product(x, weight, label, *, s=30.0, m=0.5, easy_margin=False,
                       ls_eps=0.0, tile_b=256, tile_c=1024, compute_dtype=None):
    """ArcMarginProduct.forward.

    x: (B, in_features), weight: (out_features, in_features), label: (B,) int.
    Returns (B, out_features) float32.
    """
    B, D = x.shape
    C, D2 = weight.shape
    assert D == D2

    cos_m, sin_m = math.cos(m), math.sin(m)
    th = math.cos(math.pi - m)
    mm = math.sin(math.pi - m) * m

    if compute_dtype is not None:
        # Optional: stream x / weight from HBM in a narrow dtype (e.g. bf16)
        # and feed the MXU in that dtype (f32 accumulation).
        x = x.astype(compute_dtype)
        weight = weight.astype(compute_dtype)
        mxu_dtype = compute_dtype
    else:
        mxu_dtype = jnp.float32

    # Sublane-aligned batch tiles; lane-dense (multiple-of-128) class tiles.
    TB = min(tile_b, _round_up(B, 8))
    TC = min(tile_c, _round_up(C, 128))
    Bp = _round_up(B, TB)
    Cp = _round_up(C, TC)

    if Bp != B:
        x = jnp.pad(x, ((0, Bp - B), (0, 0)))
    if Cp != C:
        weight = jnp.pad(weight, ((0, Cp - C), (0, 0)))

    label2d = label.reshape(B, 1).astype(jnp.int32)
    if Bp != B:
        label2d = jnp.pad(label2d, ((0, Bp - B), (0, 0)), constant_values=-1)

    # Normalize the (small) input once instead of once per class tile.
    xn = _l2_normalize_rows(x, tile_rows=TB)

    kernel = _make_arc_margin_kernel(s, cos_m, sin_m, th, mm, easy_margin,
                                     ls_eps, C, TC, mxu_dtype)

    # Double-buffered tiles + headroom; raise v5e's small default scoped VMEM
    # but stay within v7x's 64 MiB physical VMEM.
    in_bytes = jnp.dtype(weight.dtype).itemsize
    vmem_need = 2 * (TB * D + TC * D) * in_bytes \
        + 2 * (TB * TC * 4 + TB * 4) + (2 << 20)
    vmem_limit = int(min(max(vmem_need, 32 * 1024 * 1024), 64 * 1024 * 1024))

    out = pl.pallas_call(
        kernel,
        out_shape=jax.ShapeDtypeStruct((Bp, Cp), jnp.float32),
        grid_spec=pltpu.PrefetchScalarGridSpec(
            num_scalar_prefetch=0,
            grid=(Bp // TB, Cp // TC),          # batch outer, classes inner
            in_specs=[
                pl.BlockSpec((TB, D), lambda i, j: (i, 0)),   # xn (resident over j)
                pl.BlockSpec((TC, D), lambda i, j: (j, 0)),   # weight stream
                pl.BlockSpec((TB, 1), lambda i, j: (i, 0)),   # labels
            ],
            out_specs=pl.BlockSpec((TB, TC), lambda i, j: (i, j)),
        ),
        compiler_params=pltpu.CompilerParams(
            dimension_semantics=("parallel", "parallel"),
            vmem_limit_bytes=vmem_limit,
        ),
    )(xn, weight, label2d)

    if Bp != B or Cp != C:
        out = out[:B, :C]
    return out


if __name__ == "__main__":
    key = jax.random.PRNGKey(0)
    k_x, k_w, k_l, k_x2, k_w2, k_l2 = jax.random.split(key, 6)

    # Small shapes consistent with the module.
    batch, in_features, out_features = 8, 32, 16
    x = jax.random.normal(k_x, (batch, in_features), dtype=jnp.float32)
    limit = math.sqrt(6.0 / (in_features + out_features))       # xavier_uniform_
    weight = jax.random.uniform(k_w, (out_features, in_features),
                                dtype=jnp.float32, minval=-limit, maxval=limit)
    label = jax.random.randint(k_l, (batch,), 0, out_features, dtype=jnp.int32)

    out = arc_margin_product(x, weight, label, s=30.0, m=0.5,
                             easy_margin=False, ls_eps=0.0)
    out = jax.block_until_ready(out)
    assert out.shape == (batch, out_features)
    assert out.dtype == jnp.float32
    assert bool(jnp.all(jnp.isfinite(out)))

    # Second call exercises a multi-tile grid (padding + global column ids)
    # and the label-smoothing path, still at small shapes.
    b2, c2 = 24, 300
    x2 = jax.random.normal(k_x2, (b2, in_features), dtype=jnp.float32)
    limit2 = math.sqrt(6.0 / (in_features + c2))
    w2 = jax.random.uniform(k_w2, (c2, in_features), dtype=jnp.float32,
                            minval=-limit2, maxval=limit2)
    l2 = jax.random.randint(k_l2, (b2,), 0, c2, dtype=jnp.int32)
    out2 = arc_margin_product(x2, w2, l2, s=30.0, m=0.5, easy_margin=False,
                              ls_eps=0.1, tile_b=8, tile_c=128)
    out2 = jax.block_until_ready(out2)
    assert out2.shape == (b2, c2)
    assert bool(jnp.all(jnp.isfinite(out2)))

    print("KERNEL_OK")
</pallas_src>

<mosaic_0001>
module attributes {stable_mosaic.version = 11 : i64} {
  func.func @_l2_normalize_kernel(%arg0: i32, %arg1: memref<8x32xf32, #tpu.memory_space<vmem>>, %arg2: memref<8x32xf32, #tpu.memory_space<vmem>>) attributes {dimension_semantics = [#tpu.dimension_semantics<parallel>], iteration_bounds = array<i64: 1>, scalar_prefetch = 0 : i64, scratch_operands = 0 : i64, tpu.core_type = #tpu.core_type<tc>, window_params = [{transform_indices = @transform_0, window_bounds = array<i64: 8, 32>}, {transform_indices = @transform_1, window_bounds = array<i64: 8, 32>}]} {
    %c0 = arith.constant 0 : index
    %c0_0 = arith.constant 0 : index
    %0 = vector.load %arg1[%c0, %c0_0] : memref<8x32xf32, #tpu.memory_space<vmem>>, vector<8x32xf32>
    %1 = arith.mulf %0, %0 : vector<8x32xf32>
    %cst = arith.constant dense<0.000000e+00> : vector<8xf32>
    %2 = vector.multi_reduction <add>, %1, %cst [1] : vector<8x32xf32> to vector<8xf32>
    %3 = vector.shape_cast %2 : vector<8xf32> to vector<8x1xf32>
    %cst_1 = arith.constant 1.000000e-24 : f32
    %4 = vector.broadcast %cst_1 : f32 to vector<8x1xf32>
    %5 = arith.maximumf %3, %4 : vector<8x1xf32>
    %6 = math.rsqrt %5 : vector<8x1xf32>
    %7 = vector.broadcast %6 : vector<8x1xf32> to vector<8x32xf32>
    %8 = arith.mulf %0, %7 : vector<8x32xf32>
    %c0_2 = arith.constant 0 : index
    %c0_3 = arith.constant 0 : index
    %9 = vector.load %arg2[%c0_2, %c0_3] : memref<8x32xf32, #tpu.memory_space<vmem>>, vector<8x32xf32>
    tpu.vector_store %arg2[%c0_2, %c0_3], %8 {strides = array<i32>} : memref<8x32xf32, #tpu.memory_space<vmem>>, vector<8x32xf32>,
    return
  }
  func.func @transform_0(%arg0: i32) -> (i32, i32) {
    %c0_i32 = arith.constant 0 : i32
    %c0_i32_0 = arith.constant 0 : i32
    return %arg0, %c0_i32 : i32, i32
  }
  func.func @transform_1(%arg0: i32) -> (i32, i32) {
    %c0_i32 = arith.constant 0 : i32
    %c0_i32_0 = arith.constant 0 : i32
    return %arg0, %c0_i32 : i32, i32
  }
}

</mosaic_0001>

<llo_original>
// kernel: tpu_custom_call.1
$region0: #{tpu_custom_call.1}
  #allocation0 [shape = 'u32[]', space=smem, size = 0x4, offset = 0x4, fixed_abs, tag = 'smem constant byte address 0x4 - core index']
  #allocation1 [shape = 'u32[144,128]{1,0:T(1,128)}', space=vmem, size = 0x12000, scoped, tag = 'internal scratch']
  %s0 = inlined_call_operand.hbm [shape: f32[8,32], index: 0, kind: input, shape index: {}]
  %s1 = inlined_call_operand.hbm [shape: f32[8,32], index: 1, kind: output, shape index: {}]
  %s2 = sld [smem:[#allocation0]]
  $region18: #{tpu_custom_call.1} parent=0
    _
  %s4 = ssub.s32 1, %s2
  %s5 = scalar_select 0, %s4, %s2
  $region1: #{tpu_custom_call.1} parent=0
    #allocation2 [shape = 'u8[4096]{0}', space=vmem, size = 0x1000, scoped, tag = 'input window, operand 0, single buffered']
    #allocation3 [shape = 's32[1]{0}', space=sflag, size = 0x4, scoped, tag = 'scoped memory for tpu_custom_call.1']
    #allocation4 [shape = 's32[1]{0}', space=sflag, size = 0x4, scoped, tag = 'scoped memory for tpu_custom_call.1']
    #allocation5 [shape = 'u8[4096]{0}', space=vmem, size = 0x1000, scoped, tag = 'output window, operand 0, single buffered']
    %6 = vsyncpa [#allocation3], 0
    %7 = vsyncpa [#allocation4], 0
    // Predicated region
    $region2: #{tpu_custom_call.1} parent=1 // pred_check
      _
    $region3: #{tpu_custom_call.1} parent=1 // pred_check_branch
      %9 = sbr.rel (0) target = $region5
    $region4: #{tpu_custom_call.1} parent=1 // pred_region
      %s11 = ssub.s32 128, 128
      %12 = vsyncadd [#allocation3], %s11
      %s14 = sshll.u32 [#allocation2], 4
      %s15 = int_to_ptr.vmem [resolvable:$true] %s14
      %17 = dma.hbm_to_vmem [thread:$0]  %s0, 128, %s15, [#allocation3]
    $region5: #{tpu_custom_call.1} parent=1 // pred_fallthru
      _
    // Predicated region
    $region6: #{tpu_custom_call.1} parent=1 // pred_check
      _
    $region7: #{tpu_custom_call.1} parent=1 // pred_check_branch
      %19 = sbr.rel (0) target = $region9
    $region8: #{tpu_custom_call.1} parent=1 // pred_region
      %20 = dma.done [#allocation3], 128
    $region9: #{tpu_custom_call.1} parent=1 // pred_fallthru
      _
    %v21 = vld [vmem:[#allocation2] sm:$0xff]
    %v22 = vmul.f32 %v21, %v21
    %vm23 = vcmask 261120
    %v24 = vsel %vm23, %v22, 0.0
    %25 = vadd.xlane.f32.xlu0 %v24
    %v26 = vpop.xlane.xlu0 %25
    %v27 = vmax.f32 %v26, 1e-24
    %v28 = vrsqrt.pop %v27
    %v29 = vmul.f32 %v21, %v28
    %30 = vst.msk [vmem:[#allocation5] sm:$0xff] %vm23, %v29
    // Predicated region
    $region10: #{tpu_custom_call.1} parent=1 // pred_check
      _
    $region11: #{tpu_custom_call.1} parent=1 // pred_check_branch
      %32 = sbr.rel (0) target = $region13
    $region12: #{tpu_custom_call.1} parent=1 // pred_region
      %s34 = ssub.s32 128, 128
      %35 = vsyncadd [#allocation4], %s34
      %s37 = sshll.u32 [#allocation5], 4
      %s38 = int_to_ptr.vmem [resolvable:$true] %s37
      %40 = dma.vmem_to_hbm [thread:$0]  %s38, 128, %s1, [#allocation4]
    $region13: #{tpu_custom_call.1} parent=1 // pred_fallthru
      _
    // Predicated region
    $region14: #{tpu_custom_call.1} parent=1 // pred_check
      _
    $region15: #{tpu_custom_call.1} parent=1 // pred_check_branch
      %42 = sbr.rel (0) target = $region17
    $region16: #{tpu_custom_call.1} parent=1 // pred_region
      %43 = dma.done [#allocation4], 128
    $region17: #{tpu_custom_call.1} parent=1 // pred_fallthru
      _
    %44 = vsyncpa [#allocation3], 1
    %45 = vsyncpa [#allocation4], 1

</llo_original>
